<compile_context>
chip_gen: v7x
topology: tpu7x:2x2x1
jax: 0.10.0
libtpu: 0.0.40
codegen_flags: <defaults>
</compile_context>

<pallas_src>
import jax
import jax.numpy as jnp
from jax.experimental import pallas as pl
from jax.experimental.pallas import tpu as pltpu


# ----------------------------- config ---------------------------------------
class Cfg:
    tgt_vocab_size = 64
    embedding_size = 32
    de_hidden_size = 32
    de_num_layers = 2          # kernel below is written for exactly 2 layers
    pad_idx = 0
    embedding_drop_rate = 0.1  # identity at inference
    de_drop_rate = 0.1         # identity at inference


# ----------------------------- kernel ---------------------------------------
def decoder_kernel(x0_ref, w0_ref, b0_ref, w1_ref, b1_ref,
                   wout_ref, bout_ref, state_ref,
                   logp_ref, state_out_ref):
    B, H4 = state_ref.shape            # packed state: (B, 4H)
    H = H4 // 4

    state = state_ref[...]             # [h_prev0 | h_prev1 | c_prev0 | c_prev1]
    h_prev1 = state[:, H:2 * H]
    c_prev0 = state[:, 2 * H:3 * H]
    c_prev1 = state[:, 3 * H:4 * H]

    # Lane mask selecting the 'g' gate (PyTorch gate order [i, f, g, o]).
    lane = jax.lax.broadcasted_iota(jnp.int32, (B, H4), 1)
    g_mask = (lane >= 2 * H) & (lane < 3 * H)

    def lstm_cell(xh_bf16, w_ref, b_ref, c_prev):
        # single fused (input + recurrent) matmul, f32 accumulation
        gates = jnp.dot(xh_bf16, w_ref[...],
                        preferred_element_type=jnp.float32) + b_ref[...]   # (B, 4H) f32
        # whole-vreg activations + lane-mask select (no per-gate activation slices)
        act = jnp.where(g_mask, jnp.tanh(gates), jax.nn.sigmoid(gates))
        i = act[:, 0:H]
        f = act[:, H:2 * H]
        g = act[:, 2 * H:3 * H]
        o = act[:, 3 * H:4 * H]
        c_new = f * c_prev + i * g
        h_new = o * jnp.tanh(c_new)
        return h_new, c_new

    # layer 0: x0 = [one_hot(ids) | h_prev0] (bf16, built in wrapper);
    #          W0 = [[relu(emb) @ wih0.T]; [whh0.T]]  (embedding+ReLU folded in)
    h1, c1 = lstm_cell(x0_ref[...], w0_ref, b0_ref, c_prev0)

    # layer 1: fused operand [h1 | h_prev1]
    x1 = jnp.concatenate([h1, h_prev1], axis=1).astype(jnp.bfloat16)       # (B, 2H)
    h2, c2 = lstm_cell(x1, w1_ref, b1_ref, c_prev1)

    # single lane-dense (B, 4H=128) store of the new packed state
    state_out_ref[...] = jnp.concatenate([h1, h2, c1, c2], axis=1)

    # output projection (vocab padded to a multiple of 128 lanes) + log_softmax
    logits = jnp.dot(h2.astype(jnp.bfloat16), wout_ref[...],
                     preferred_element_type=jnp.float32) + bout_ref[...]   # (B, VP)
    m = jnp.max(logits, axis=1, keepdims=True)
    z = logits - m
    lse = jnp.log(jnp.sum(jnp.exp(z), axis=1, keepdims=True))
    logp_ref[...] = z - lse


# ----------------------------- wrapper ---------------------------------------
def _lstm_rnn_decoder(ids, params, hidden):
    """ids: (B,) int32 tokens; hidden: (h0, c0) each (L=2, B, H).
    Returns (log_probs (B, V), (h_n, c_n))."""
    h0, c0 = hidden
    B = ids.shape[0]
    L, _, H = h0.shape
    assert L == 2, "kernel is written for de_num_layers == 2"
    V = params["emb"].shape[0]
    VP = ((V + 127) // 128) * 128      # lane-dense padded vocab width

    # ---- weight / operand prep (hoisted & CSE'd by XLA under jit) ----------
    # embedding + ReLU + layer-0 input matmul folded into one (V, 4H) table
    table0 = jnp.maximum(params["emb"], 0.0) @ params["wih0"].T                       # (V, 4H)
    w0 = jnp.concatenate([table0, params["whh0"].T], axis=0).astype(jnp.bfloat16)     # (V+H, 4H)
    b0 = (params["bih0"] + params["bhh0"]).reshape(1, 4 * H).astype(jnp.float32)
    w1 = jnp.concatenate([params["wih1"].T, params["whh1"].T],
                         axis=0).astype(jnp.bfloat16)                                 # (2H, 4H)
    b1 = (params["bih1"] + params["bhh1"]).reshape(1, 4 * H).astype(jnp.float32)
    wout = jnp.pad(params["wout"].T, ((0, 0), (0, VP - V))).astype(jnp.bfloat16)      # (H, VP)
    bout = jnp.pad(params["bout"], (0, VP - V),
                   constant_values=-1e30).reshape(1, VP).astype(jnp.float32)          # (1, VP)

    # fused layer-0 operand [one_hot(ids) | h_prev0]   (bf16 matmul operand)
    onehot = jax.nn.one_hot(ids.astype(jnp.int32), V, dtype=jnp.float32)              # (B, V)
    x0 = jnp.concatenate([onehot, h0[0]], axis=1).astype(jnp.bfloat16)                # (B, V+H)

    # packed lane-dense state [h_l0 | h_l1 | c_l0 | c_l1] -> (B, 4H)
    state_in = jnp.concatenate([h0[0], h0[1], c0[0], c0[1]], axis=1).astype(jnp.float32)

    vmem = pl.BlockSpec(memory_space=pltpu.MemorySpace.VMEM)
    inputs = (x0, w0, b0, w1, b1, wout, bout, state_in)

    logp_pad, state_out = pl.pallas_call(
        decoder_kernel,
        out_shape=(jax.ShapeDtypeStruct((B, VP), jnp.float32),       # padded log-probs
                   jax.ShapeDtypeStruct((B, 4 * H), jnp.float32)),   # packed new state
        in_specs=[vmem] * len(inputs),
        out_specs=(vmem, vmem),
        input_output_aliases={7: 1},   # update packed h/c state in place
    )(*inputs)

    logp = logp_pad[:, :V]
    hn = jnp.stack([state_out[:, 0:H], state_out[:, H:2 * H]], axis=0)
    cn = jnp.stack([state_out[:, 2 * H:3 * H], state_out[:, 3 * H:4 * H]], axis=0)
    return logp, (hn, cn)


lstm_rnn_decoder = jax.jit(_lstm_rnn_decoder)


# ------------------------- pure-JAX reference --------------------------------
def reference(ids, params, hidden):
    h0, c0 = hidden
    H = h0.shape[-1]
    emb = params["emb"][ids]                      # (B, E)
    x = jnp.maximum(emb, 0.0)

    def cell(x_in, hp, cp, wih, whh, bih, bhh):
        g = x_in @ wih.T + hp @ whh.T + bih + bhh
        i = jax.nn.sigmoid(g[:, 0 * H:1 * H])
        f = jax.nn.sigmoid(g[:, 1 * H:2 * H])
        gg = jnp.tanh(g[:, 2 * H:3 * H])
        o = jax.nn.sigmoid(g[:, 3 * H:4 * H])
        c = f * cp + i * gg
        return o * jnp.tanh(c), c

    h1, c1 = cell(x, h0[0], c0[0], params["wih0"], params["whh0"],
                  params["bih0"], params["bhh0"])
    h2, c2 = cell(h1, h0[1], c0[1], params["wih1"], params["whh1"],
                  params["bih1"], params["bhh1"])
    logits = h2 @ params["wout"].T + params["bout"]
    logp = jax.nn.log_softmax(logits, axis=1)
    return logp, (jnp.stack([h1, h2]), jnp.stack([c1, c2]))


# ----------------------------- main ------------------------------------------
if __name__ == "__main__":
    cfg = Cfg()
    V, E, H, L = cfg.tgt_vocab_size, cfg.embedding_size, cfg.de_hidden_size, cfg.de_num_layers
    B = 4

    key = jax.random.PRNGKey(0)
    ks = jax.random.split(key, 16)
    k_inv = 1.0 / jnp.sqrt(jnp.float32(H))

    def unif(k, shape):
        return jax.random.uniform(k, shape, jnp.float32, -k_inv, k_inv)

    emb = jax.random.normal(ks[0], (V, E), jnp.float32)
    emb = emb.at[cfg.pad_idx].set(0.0)            # padding_idx row zeroed

    params = {
        "emb": emb,
        "wih0": unif(ks[1], (4 * H, E)), "whh0": unif(ks[2], (4 * H, H)),
        "bih0": unif(ks[3], (4 * H,)),   "bhh0": unif(ks[4], (4 * H,)),
        "wih1": unif(ks[5], (4 * H, H)), "whh1": unif(ks[6], (4 * H, H)),
        "bih1": unif(ks[7], (4 * H,)),   "bhh1": unif(ks[8], (4 * H,)),
        "wout": unif(ks[9], (V, H)),     "bout": unif(ks[10], (V,)),
    }

    ids = jax.random.randint(ks[11], (B,), 0, V, jnp.int32)
    h0 = 0.1 * jax.random.normal(ks[12], (L, B, H), jnp.float32)
    c0 = 0.1 * jax.random.normal(ks[13], (L, B, H), jnp.float32)

    logp, (hn, cn) = lstm_rnn_decoder(ids, params, (h0, c0))
    jax.block_until_ready((logp, hn, cn))

    logp_r, (hn_r, cn_r) = reference(ids, params, (h0, c0))
    # bf16 matmul operands (f32 accumulation) -> loosened tolerance vs f32 ref
    assert jnp.allclose(logp, logp_r, atol=2e-2), "log-prob mismatch"
    assert jnp.allclose(hn, hn_r, atol=2e-2), "h_n mismatch"
    assert jnp.allclose(cn, cn_r, atol=2e-2), "c_n mismatch"

    print("KERNEL_OK")
</pallas_src>

<mosaic_0001>
module attributes {stable_mosaic.version = 11 : i64} {
  func.func @decoder_kernel(%arg0: memref<4x96xbf16, #tpu.memory_space<vmem>>, %arg1: memref<96x128xbf16, #tpu.memory_space<vmem>>, %arg2: memref<1x128xf32, #tpu.memory_space<vmem>>, %arg3: memref<64x128xbf16, #tpu.memory_space<vmem>>, %arg4: memref<1x128xf32, #tpu.memory_space<vmem>>, %arg5: memref<32x128xbf16, #tpu.memory_space<vmem>>, %arg6: memref<1x128xf32, #tpu.memory_space<vmem>>, %arg7: memref<4x128xf32, #tpu.memory_space<vmem>>, %arg8: memref<4x128xf32, #tpu.memory_space<vmem>>, %arg9: memref<4x128xf32, #tpu.memory_space<vmem>>) attributes {dimension_semantics = [], scalar_prefetch = 0 : i64, scratch_operands = 0 : i64, tpu.core_type = #tpu.core_type<tc>} {
    %c0 = arith.constant 0 : index
    %c0_0 = arith.constant 0 : index
    %0 = vector.load %arg7[%c0, %c0_0] : memref<4x128xf32, #tpu.memory_space<vmem>>, vector<4x128xf32>
    %1 = vector.extract_strided_slice %0 {offsets = [0, 32], sizes = [4, 32], strides = [1, 1]} : vector<4x128xf32> to vector<4x32xf32>
    %2 = vector.extract_strided_slice %0 {offsets = [0, 64], sizes = [4, 32], strides = [1, 1]} : vector<4x128xf32> to vector<4x32xf32>
    %3 = vector.extract_strided_slice %0 {offsets = [0, 96], sizes = [4, 32], strides = [1, 1]} : vector<4x128xf32> to vector<4x32xf32>
    %4 = tpu.iota {dimensions = array<i32: 1>} : vector<4x128xi32>
    %c64_i32 = arith.constant 64 : i32
    %5 = vector.broadcast %c64_i32 : i32 to vector<4x128xi32>
    %6 = arith.cmpi sge, %4, %5 : vector<4x128xi32>
    %c96_i32 = arith.constant 96 : i32
    %7 = vector.broadcast %c96_i32 : i32 to vector<4x128xi32>
    %8 = arith.cmpi slt, %4, %7 : vector<4x128xi32>
    %9 = arith.andi %6, %8 : vector<4x128xi1>
    %c0_1 = arith.constant 0 : index
    %c0_2 = arith.constant 0 : index
    %10 = vector.load %arg0[%c0_1, %c0_2] : memref<4x96xbf16, #tpu.memory_space<vmem>>, vector<4x96xbf16>
    %c0_3 = arith.constant 0 : index
    %c0_4 = arith.constant 0 : index
    %11 = vector.load %arg1[%c0_3, %c0_4] : memref<96x128xbf16, #tpu.memory_space<vmem>>, vector<96x128xbf16>
    %cst = arith.constant dense<0.000000e+00> : vector<4x128xf32>
    %12 = tpu.matmul %10, %11, %cst {dimension_numbers = #tpu.dot_dimension_numbers<[1], [0], [0], [1], [0, 0, 1, 1], [], []>} : vector<4x96xbf16>, vector<96x128xbf16>, vector<4x128xf32> -> vector<4x128xf32>
    %c0_5 = arith.constant 0 : index
    %c0_6 = arith.constant 0 : index
    %13 = vector.load %arg2[%c0_5, %c0_6] : memref<1x128xf32, #tpu.memory_space<vmem>>, vector<1x128xf32>
    %14 = vector.broadcast %13 : vector<1x128xf32> to vector<4x128xf32>
    %15 = arith.addf %12, %14 : vector<4x128xf32>
    %16 = math.tanh %15 : vector<4x128xf32>
    %17 = arith.negf %15 : vector<4x128xf32>
    %18 = math.exp %17 : vector<4x128xf32>
    %cst_7 = arith.constant 1.000000e+00 : f32
    %19 = vector.broadcast %cst_7 : f32 to vector<4x128xf32>
    %20 = arith.addf %19, %18 : vector<4x128xf32>
    %21 = arith.divf %19, %20 : vector<4x128xf32>
    %22 = arith.select %9, %16, %21 : vector<4x128xi1>, vector<4x128xf32>
    %23 = vector.extract_strided_slice %22 {offsets = [0, 0], sizes = [4, 32], strides = [1, 1]} : vector<4x128xf32> to vector<4x32xf32>
    %24 = vector.extract_strided_slice %22 {offsets = [0, 32], sizes = [4, 32], strides = [1, 1]} : vector<4x128xf32> to vector<4x32xf32>
    %25 = vector.extract_strided_slice %22 {offsets = [0, 64], sizes = [4, 32], strides = [1, 1]} : vector<4x128xf32> to vector<4x32xf32>
    %26 = vector.extract_strided_slice %22 {offsets = [0, 96], sizes = [4, 32], strides = [1, 1]} : vector<4x128xf32> to vector<4x32xf32>
    %27 = arith.mulf %24, %2 : vector<4x32xf32>
    %28 = arith.mulf %23, %25 : vector<4x32xf32>
    %29 = arith.addf %27, %28 : vector<4x32xf32>
    %30 = math.tanh %29 : vector<4x32xf32>
    %31 = arith.mulf %26, %30 : vector<4x32xf32>
    %32 = tpu.concatenate %31, %1 in 1 : vector<4x32xf32>, vector<4x32xf32> -> vector<4x64xf32>
    %33 = arith.truncf %32 : vector<4x64xf32> to vector<4x64xbf16>
    %c0_8 = arith.constant 0 : index
    %c0_9 = arith.constant 0 : index
    %34 = vector.load %arg3[%c0_8, %c0_9] : memref<64x128xbf16, #tpu.memory_space<vmem>>, vector<64x128xbf16>
    %cst_10 = arith.constant dense<0.000000e+00> : vector<4x128xf32>
    %35 = tpu.matmul %33, %34, %cst_10 {dimension_numbers = #tpu.dot_dimension_numbers<[1], [0], [0], [1], [0, 0, 1, 1], [], []>} : vector<4x64xbf16>, vector<64x128xbf16>, vector<4x128xf32> -> vector<4x128xf32>
    %c0_11 = arith.constant 0 : index
    %c0_12 = arith.constant 0 : index
    %36 = vector.load %arg4[%c0_11, %c0_12] : memref<1x128xf32, #tpu.memory_space<vmem>>, vector<1x128xf32>
    %37 = vector.broadcast %36 : vector<1x128xf32> to vector<4x128xf32>
    %38 = arith.addf %35, %37 : vector<4x128xf32>
    %39 = math.tanh %38 : vector<4x128xf32>
    %40 = arith.negf %38 : vector<4x128xf32>
    %41 = math.exp %40 : vector<4x128xf32>
    %cst_13 = arith.constant 1.000000e+00 : f32
    %42 = vector.broadcast %cst_13 : f32 to vector<4x128xf32>
    %43 = arith.addf %42, %41 : vector<4x128xf32>
    %44 = arith.divf %42, %43 : vector<4x128xf32>
    %45 = arith.select %9, %39, %44 : vector<4x128xi1>, vector<4x128xf32>
    %46 = vector.extract_strided_slice %45 {offsets = [0, 0], sizes = [4, 32], strides = [1, 1]} : vector<4x128xf32> to vector<4x32xf32>
    %47 = vector.extract_strided_slice %45 {offsets = [0, 32], sizes = [4, 32], strides = [1, 1]} : vector<4x128xf32> to vector<4x32xf32>
    %48 = vector.extract_strided_slice %45 {offsets = [0, 64], sizes = [4, 32], strides = [1, 1]} : vector<4x128xf32> to vector<4x32xf32>
    %49 = vector.extract_strided_slice %45 {offsets = [0, 96], sizes = [4, 32], strides = [1, 1]} : vector<4x128xf32> to vector<4x32xf32>
    %50 = arith.mulf %47, %3 : vector<4x32xf32>
    %51 = arith.mulf %46, %48 : vector<4x32xf32>
    %52 = arith.addf %50, %51 : vector<4x32xf32>
    %53 = math.tanh %52 : vector<4x32xf32>
    %54 = arith.mulf %49, %53 : vector<4x32xf32>
    %55 = tpu.concatenate %31, %54, %29, %52 in 1 : vector<4x32xf32>, vector<4x32xf32>, vector<4x32xf32>, vector<4x32xf32> -> vector<4x128xf32>
    %c0_14 = arith.constant 0 : index
    %c0_15 = arith.constant 0 : index
    %56 = vector.load %arg9[%c0_14, %c0_15] : memref<4x128xf32, #tpu.memory_space<vmem>>, vector<4x128xf32>
    tpu.vector_store %arg9[%c0_14, %c0_15], %55 {strides = array<i32>} : memref<4x128xf32, #tpu.memory_space<vmem>>, vector<4x128xf32>,
    %57 = arith.truncf %54 : vector<4x32xf32> to vector<4x32xbf16>
    %c0_16 = arith.constant 0 : index
    %c0_17 = arith.constant 0 : index
    %58 = vector.load %arg5[%c0_16, %c0_17] : memref<32x128xbf16, #tpu.memory_space<vmem>>, vector<32x128xbf16>
    %cst_18 = arith.constant dense<0.000000e+00> : vector<4x128xf32>
    %59 = tpu.matmul %57, %58, %cst_18 {dimension_numbers = #tpu.dot_dimension_numbers<[1], [0], [0], [1], [0, 0, 1, 1], [], []>} : vector<4x32xbf16>, vector<32x128xbf16>, vector<4x128xf32> -> vector<4x128xf32>
    %c0_19 = arith.constant 0 : index
    %c0_20 = arith.constant 0 : index
    %60 = vector.load %arg6[%c0_19, %c0_20] : memref<1x128xf32, #tpu.memory_space<vmem>>, vector<1x128xf32>
    %61 = vector.broadcast %60 : vector<1x128xf32> to vector<4x128xf32>
    %62 = arith.addf %59, %61 : vector<4x128xf32>
    %cst_21 = arith.constant dense<0xFF800000> : vector<4xf32>
    %63 = vector.multi_reduction <maximumf>, %62, %cst_21 [1] : vector<4x128xf32> to vector<4xf32>
    %64 = vector.shape_cast %63 : vector<4xf32> to vector<4x1xf32>
    %65 = vector.broadcast %64 : vector<4x1xf32> to vector<4x128xf32>
    %66 = arith.subf %62, %65 : vector<4x128xf32>
    %67 = math.exp %66 : vector<4x128xf32>
    %cst_22 = arith.constant dense<0.000000e+00> : vector<4xf32>
    %68 = vector.multi_reduction <add>, %67, %cst_22 [1] : vector<4x128xf32> to vector<4xf32>
    %69 = vector.shape_cast %68 : vector<4xf32> to vector<4x1xf32>
    %70 = math.log %69 : vector<4x1xf32>
    %71 = vector.broadcast %70 : vector<4x1xf32> to vector<4x128xf32>
    %72 = arith.subf %66, %71 : vector<4x128xf32>
    %c0_23 = arith.constant 0 : index
    %c0_24 = arith.constant 0 : index
    %73 = vector.load %arg8[%c0_23, %c0_24] : memref<4x128xf32, #tpu.memory_space<vmem>>, vector<4x128xf32>
    tpu.vector_store %arg8[%c0_23, %c0_24], %72 {strides = array<i32>} : memref<4x128xf32, #tpu.memory_space<vmem>>, vector<4x128xf32>,
    return
  }
}

</mosaic_0001>

<llo_original>
// kernel: _lstm_rnn_decoder.1
$region0: #{_lstm_rnn_decoder.1}
  #allocation0 [shape = 'u32[]', space=smem, size = 0x4, offset = 0x4, fixed_abs, tag = 'smem constant byte address 0x4 - core index']
  #allocation1 [shape = 'u32[144,128]{1,0:T(1,128)}', space=vmem, size = 0x12000, scoped, tag = 'internal scratch']
  %s0 = inlined_call_operand.vmem [shape: bf16[4,96], index: 0, kind: input, shape index: {}]
  %s1 = inlined_call_operand.vmem [shape: bf16[96,128], index: 1, kind: input, shape index: {}]
  %s2 = inlined_call_operand.vmem [shape: f32[1,128], index: 2, kind: input, shape index: {}]
  %s3 = inlined_call_operand.vmem [shape: bf16[64,128], index: 3, kind: input, shape index: {}]
  %s4 = inlined_call_operand.vmem [shape: f32[1,128], index: 4, kind: input, shape index: {}]
  %s5 = inlined_call_operand.vmem [shape: bf16[32,128], index: 5, kind: input, shape index: {}]
  %s6 = inlined_call_operand.vmem [shape: f32[1,128], index: 6, kind: input, shape index: {}]
  %s7 = inlined_call_operand.vmem [shape: f32[4,128], index: 7, kind: input, shape index: {}, may-alias: {7,9}]
  %s8 = inlined_call_operand.hbm [shape: f32[4,128], index: 8, kind: output, shape index: {0}]
  %s9 = inlined_call_operand.vmem [shape: f32[4,128], index: 9, kind: output, shape index: {1}, may-alias: {7,9}]
  %10 = xla_tuple %s8, %s9
  %s11 = sld [smem:[#allocation0]]
  $region50: #{_lstm_rnn_decoder.1} parent=0
    _
  %s13 = ssub.s32 1, %s11
  %s14 = scalar_select 0, %s13, %s11
  $region1: #{_lstm_rnn_decoder.1} parent=0
    #allocation2 [shape = 'u8[2048]{0}', space=vmem, size = 0x800, scoped, tag = 'output window, operand 0, single buffered']
    #allocation3 [shape = 's32[1]{0}', space=sflag, size = 0x4, scoped, tag = 'scoped memory for _lstm_rnn_decoder.1']
    %15 = vsyncpa [#allocation3], 0
    // Predicated region
    $region2: #{_lstm_rnn_decoder.1} parent=1 // pred_check
      _
    $region3: #{_lstm_rnn_decoder.1} parent=1 // pred_check_branch
      %17 = sbr.rel (0) target = $region5
    $region4: #{_lstm_rnn_decoder.1} parent=1 // pred_region
      _
    $region5: #{_lstm_rnn_decoder.1} parent=1 // pred_fallthru
      _
    // Predicated region
    $region6: #{_lstm_rnn_decoder.1} parent=1 // pred_check
      _
    $region7: #{_lstm_rnn_decoder.1} parent=1 // pred_check_branch
      %19 = sbr.rel (0) target = $region9
    $region8: #{_lstm_rnn_decoder.1} parent=1 // pred_region
      _
    $region9: #{_lstm_rnn_decoder.1} parent=1 // pred_fallthru
      _
    // Predicated region
    $region10: #{_lstm_rnn_decoder.1} parent=1 // pred_check
      _
    $region11: #{_lstm_rnn_decoder.1} parent=1 // pred_check_branch
      %21 = sbr.rel (0) target = $region13
    $region12: #{_lstm_rnn_decoder.1} parent=1 // pred_region
      _
    $region13: #{_lstm_rnn_decoder.1} parent=1 // pred_fallthru
      _
    // Predicated region
    $region14: #{_lstm_rnn_decoder.1} parent=1 // pred_check
      _
    $region15: #{_lstm_rnn_decoder.1} parent=1 // pred_check_branch
      %23 = sbr.rel (0) target = $region17
    $region16: #{_lstm_rnn_decoder.1} parent=1 // pred_region
      _
    $region17: #{_lstm_rnn_decoder.1} parent=1 // pred_fallthru
      _
    // Predicated region
    $region18: #{_lstm_rnn_decoder.1} parent=1 // pred_check
      _
    $region19: #{_lstm_rnn_decoder.1} parent=1 // pred_check_branch
      %25 = sbr.rel (0) target = $region21
    $region20: #{_lstm_rnn_decoder.1} parent=1 // pred_region
      _
    $region21: #{_lstm_rnn_decoder.1} parent=1 // pred_fallthru
      _
    // Predicated region
    $region22: #{_lstm_rnn_decoder.1} parent=1 // pred_check
      _
    $region23: #{_lstm_rnn_decoder.1} parent=1 // pred_check_branch
      %27 = sbr.rel (0) target = $region25
    $region24: #{_lstm_rnn_decoder.1} parent=1 // pred_region
      _
    $region25: #{_lstm_rnn_decoder.1} parent=1 // pred_fallthru
      _
    // Predicated region
    $region26: #{_lstm_rnn_decoder.1} parent=1 // pred_check
      _
    $region27: #{_lstm_rnn_decoder.1} parent=1 // pred_check_branch
      %29 = sbr.rel (0) target = $region29
    $region28: #{_lstm_rnn_decoder.1} parent=1 // pred_region
      _
    $region29: #{_lstm_rnn_decoder.1} parent=1 // pred_fallthru
      _
    // Predicated region
    $region30: #{_lstm_rnn_decoder.1} parent=1 // pred_check
      _
    $region31: #{_lstm_rnn_decoder.1} parent=1 // pred_check_branch
      %31 = sbr.rel (0) target = $region33
    $region32: #{_lstm_rnn_decoder.1} parent=1 // pred_region
      _
    $region33: #{_lstm_rnn_decoder.1} parent=1 // pred_fallthru
      _
    %v33 = vld [vmem:[%s7] sm:$0xf]
    %v34 = vlaneseq
    %v35 = vand.u32 %v34, 127
    %vm36 = vcmp.ge.s32.totalorder %v35, 64
    %vm37 = vcmp.lt.s32.totalorder %v35, 96
    %vm38 = vmand %vm36, %vm37
    %v39 = vld [vmem:[%s0] sm:$0x3]
    %v40 = vld [vmem:[%s1] sm:$0xf]
    %v41 = vld [vmem:[%s1 + $0x4] sm:$0xf]
    %v42 = vld [vmem:[%s1 + $0x8] sm:$0xf]
    %v43 = vld [vmem:[%s1 + $0xc] sm:$0xf]
    %v44 = vld [vmem:[%s1 + $0x10] sm:$0xf]
    %v45 = vld [vmem:[%s1 + $0x14] sm:$0xf]
    %v46 = vld [vmem:[%s1 + $0x18] sm:$0xf]
    %v47 = vld [vmem:[%s1 + $0x1c] sm:$0xf]
    %v48 = vld [vmem:[%s1 + $0x20] sm:$0xf]
    %v49 = vld [vmem:[%s1 + $0x24] sm:$0xf]
    %v50 = vld [vmem:[%s1 + $0x28] sm:$0xf]
    %v51 = vld [vmem:[%s1 + $0x2c] sm:$0xf]
    %v52 = vld [vmem:[%s2] sm:$0x1]
    %v54 = vlaneseq
    %v55 = vshrl.u32 %v54, 7
    %v56 = vsub.s32 0, %v55
    %v57 = vrot.slane %v52, %v56
    %v71 = vunpack.c.l.b16 %v40
    %v72 = vunpack.c.l.b16 %v41
    %v73 = vunpack.c.l.b16 %v42
    %v74 = vunpack.c.l.b16 %v43
    %v75 = vunpack.c.l.b16 %v44
    %v76 = vunpack.c.l.b16 %v45
    %v77 = vunpack.c.l.b16 %v46
    %v78 = vunpack.c.l.b16 %v47
    %v79 = vunpack.c.l.b16 %v48
    %v80 = vunpack.c.l.b16 %v49
    %v81 = vunpack.c.l.b16 %v50
    %v82 = vunpack.c.l.b16 %v51
    %v83 = vpack.c.b16 %v72, %v71
    %v84 = vpack.c.b16 %v74, %v73
    %v85 = vpack.c.b16 %v76, %v75
    %v86 = vpack.c.b16 %v78, %v77
    %v87 = vpack.c.b16 %v80, %v79
    %v88 = vpack.c.b16 %v82, %v81
    %vm95 = vcmask 785408
    %v97 = vsel %vm95, %v39, 0
    %99 = vmatprep.subr.bf16.mxu0 0
    %100 = vmatpush1.bf16.msra.mxu0 %v83
    %101 = vmatprep.subr.bf16.mxu0 0
    %102 = vmatpush1.bf16.msra.mxu0 %v84
    %103 = vmatprep.subr.bf16.mxu0 0
    %104 = vmatpush1.bf16.msra.mxu0 %v85
    %105 = vmatprep.subr.bf16.mxu0 0
    %106 = vmatpush1.bf16.msra.mxu0 %v86
    %107 = vmatprep.subr.bf16.mxu0 0
    %108 = vmatpush1.bf16.msra.mxu0 %v87
    %109 = vmatprep.subr.bf16.mxu0 0
    %110 = vmatpush1.bf16.msra.mxu0 %v88
    %111 = vmatprep.subr.bf16.mxu0 0
    %112 = vmatpush1.bf16.msra.mxu0 0
    %113 = vmatprep.subr.bf16.mxu0 0
    %114 = vmatpush1.bf16.msra.mxu0 0
    %115 = vmatprep.subr.bf16.mxu0 0
    %116 = vmatpush1.bf16.msra.mxu0 0
    %117 = vmatprep.subr.bf16.mxu0 0
    %118 = vmatpush1.bf16.msra.mxu0 0
    %119 = vmatprep.subr.bf16.mxu0 0
    %120 = vmatpush1.bf16.msra.mxu0 0
    %121 = vmatprep.subr.bf16.mxu0 0
    %122 = vmatpush1.bf16.msra.mxu0 0
    %123 = vmatprep.subr.bf16.mxu0 0
    %124 = vmatpush1.bf16.msra.mxu0 0
    %125 = vmatprep.subr.bf16.mxu0 0
    %126 = vmatpush1.bf16.msra.mxu0 0
    %127 = vmatprep.subr.bf16.mxu0 0
    %128 = vmatpush1.bf16.msra.mxu0 0
    %129 = vmatprep.subr.bf16.mxu0 0
    %130 = vmatpush1.bf16.msra.mxu0 0
    %131 = vmatprep.mubr.bf16.mxu0 0
    %132 = vmatmul.mubr.bf16.gmra.mrb[0].mxu0 %v97
    %v133 = vpop.f32.mrb[0].mxu0
    %v134 = vadd.f32 %v57, %v133
    %v135 = vpop.f32.mrb[0].mxu0
    %v136 = vpop.f32.mrb[0].mxu0
    %v137 = vpop.f32.mrb[0].mxu0
    %138 = vdwg.mxu0
    %v139 = vtanh.pop %v134
    %v140 = vxor.u32 %v134, 2147483648
    %v141 = vmul.f32 %v140, 1.442695
    %v142 = vpow.pop %v141
    %v143 = vadd.f32 %v142, 1.0
    %v144 = vrcp.pop %v143
    %v145 = vmul.f32 1.0, %v144
    %v146 = vsel %vm38, %v139, %v145
    %148 = vrot.lane.b32.xlu0 %v33, 96
    %v149 = vpop.permute.xlu0 %148
    %v151 = vmul.f32 %v146, %v149
    %153 = vrot.lane.b32.xlu0 %v146, 64
    %v154 = vpop.permute.xlu0 %153
    %v156 = vmul.f32 %v146, %v154
    %158 = vrot.lane.b32.xlu0 %v156, 32
    %v159 = vpop.permute.xlu0 %158
    %v161 = vadd.f32 %v151, %v159
    %v162 = vtanh.pop %v161
    %164 = vrot.lane.b32.xlu0 %v162, 64
    %v165 = vpop.permute.xlu0 %164
    %v167 = vmul.f32 %v146, %v165
    %169 = vrot.lane.b32.xlu0 %v167, 32
    %v170 = vpop.permute.xlu0 %169
    %vm172 = vcmask 261120
    %v173 = vsel %vm172, %v170, %v33
    %v174 = vpack.c.bf16 %v173, %v173
    %v175 = vld [vmem:[%s3] sm:$0xf]
    %v176 = vld [vmem:[%s3 + $0x4] sm:$0xf]
    %v177 = vld [vmem:[%s3 + $0x8] sm:$0xf]
    %v178 = vld [vmem:[%s3 + $0xc] sm:$0xf]
    %v179 = vld [vmem:[%s3 + $0x10] sm:$0xf]
    %v180 = vld [vmem:[%s3 + $0x14] sm:$0xf]
    %v181 = vld [vmem:[%s3 + $0x18] sm:$0xf]
    %v182 = vld [vmem:[%s3 + $0x1c] sm:$0xf]
    %v183 = vld [vmem:[%s4] sm:$0x1]
    %v185 = vlaneseq
    %v186 = vshrl.u32 %v185, 7
    %v187 = vsub.s32 0, %v186
    %v188 = vrot.slane %v183, %v187
    %v198 = vunpack.c.l.b16 %v175
    %v199 = vunpack.c.l.b16 %v176
    %v200 = vunpack.c.l.b16 %v177
    %v201 = vunpack.c.l.b16 %v178
    %v202 = vunpack.c.l.b16 %v179
    %v203 = vunpack.c.l.b16 %v180
    %v204 = vunpack.c.l.b16 %v181
    %v205 = vunpack.c.l.b16 %v182
    %v206 = vpack.c.b16 %v199, %v198
    %v207 = vpack.c.b16 %v201, %v200
    %v208 = vpack.c.b16 %v203, %v202
    %v209 = vpack.c.b16 %v205, %v204
    %vm214 = vcmask 523264
    %v216 = vsel %vm214, %v174, 0
    %218 = vmatprep.subr.bf16.mxu0 0
    %219 = vmatpush1.bf16.msra.mxu0 %v206
    %220 = vmatprep.subr.bf16.mxu0 0
    %221 = vmatpush1.bf16.msra.mxu0 %v207
    %222 = vmatprep.subr.bf16.mxu0 0
    %223 = vmatpush1.bf16.msra.mxu0 %v208
    %224 = vmatprep.subr.bf16.mxu0 0
    %225 = vmatpush1.bf16.msra.mxu0 %v209
    %226 = vmatprep.subr.bf16.mxu0 0
    %227 = vmatpush1.bf16.msra.mxu0 0
    %228 = vmatprep.subr.bf16.mxu0 0
    %229 = vmatpush1.bf16.msra.mxu0 0
    %230 = vmatprep.subr.bf16.mxu0 0
    %231 = vmatpush1.bf16.msra.mxu0 0
    %232 = vmatprep.subr.bf16.mxu0 0
    %233 = vmatpush1.bf16.msra.mxu0 0
    %234 = vmatprep.subr.bf16.mxu0 0
    %235 = vmatpush1.bf16.msra.mxu0 0
    %236 = vmatprep.subr.bf16.mxu0 0
    %237 = vmatpush1.bf16.msra.mxu0 0
    %238 = vmatprep.subr.bf16.mxu0 0
    %239 = vmatpush1.bf16.msra.mxu0 0
    %240 = vmatprep.subr.bf16.mxu0 0
    %241 = vmatpush1.bf16.msra.mxu0 0
    %242 = vmatprep.subr.bf16.mxu0 0
    %243 = vmatpush1.bf16.msra.mxu0 0
    %244 = vmatprep.subr.bf16.mxu0 0
    %245 = vmatpush1.bf16.msra.mxu0 0
    %246 = vmatprep.subr.bf16.mxu0 0
    %247 = vmatpush1.bf16.msra.mxu0 0
    %248 = vmatprep.subr.bf16.mxu0 0
    %249 = vmatpush1.bf16.msra.mxu0 0
    %250 = vmatprep.mubr.bf16.mxu0 0
    %251 = vmatmul.mubr.bf16.gmra.mrb[0].mxu0 %v216
    %v252 = vpop.f32.mrb[0].mxu0
    %v253 = vadd.f32 %v188, %v252
    %v254 = vpop.f32.mrb[0].mxu0
    %v255 = vpop.f32.mrb[0].mxu0
    %v256 = vpop.f32.mrb[0].mxu0
    %257 = vdwg.mxu0
    %v258 = vtanh.pop %v253
    %v259 = vxor.u32 %v253, 2147483648
    %v260 = vmul.f32 %v259, 1.442695
    %v261 = vpow.pop %v260
    %v262 = vadd.f32 %v261, 1.0
    %v263 = vrcp.pop %v262
    %v264 = vmul.f32 1.0, %v263
    %v265 = vsel %vm38, %v258, %v264
    %266 = vrot.lane.b32.xlu0 %v33, 64
    %v267 = vpop.permute.xlu0 %266
    %v269 = vmul.f32 %v265, %v267
    %271 = vrot.lane.b32.xlu0 %v265, 64
    %v272 = vpop.permute.xlu0 %271
    %v274 = vmul.f32 %v265, %v272
    %276 = vrot.lane.b32.xlu0 %v274, 32
    %v277 = vpop.permute.xlu0 %276
    %v279 = vadd.f32 %v269, %v277
    %v280 = vtanh.pop %v279
    %282 = vrot.lane.b32.xlu0 %v280, 64
    %v283 = vpop.permute.xlu0 %282
    %v285 = vmul.f32 %v265, %v283
    %287 = vrot.lane.b32.xlu0 %v285, 64
    %v288 = vpop.permute.xlu0 %287
    %291 = vrot.lane.b32.xlu0 %v161, 32
    %v292 = vpop.permute.xlu0 %291
    %295 = vrot.lane.b32.xlu0 %v279, 64
    %v296 = vpop.permute.xlu0 %295
    %v298 = vsel %vm172, %v170, %v288
    %v299 = vsel %vm214, %v298, %v292
    %v300 = vsel %vm95, %v299, %v296
    %301 = vst [vmem:[%s9] sm:$0xf] %v300
    %v302 = vpack.c.bf16 %v285, %v285
    %v303 = vld [vmem:[%s5] sm:$0xf]
    %v304 = vld [vmem:[%s5 + $0x4] sm:$0xf]
    %v305 = vld [vmem:[%s5 + $0x8] sm:$0xf]
    %v306 = vld [vmem:[%s5 + $0xc] sm:$0xf]
    %v307 = vld [vmem:[%s6] sm:$0x1]
    %v309 = vlaneseq
    %v310 = vshrl.u32 %v309, 7
    %v311 = vsub.s32 0, %v310
    %v312 = vrot.slane %v307, %v311
    %315 = vrot.lane.b32.xlu0 %v302, 32
    %v316 = vpop.permute.xlu0 %315
    %v321 = vunpack.c.l.b16 %v303
    %v322 = vunpack.c.l.b16 %v304
    %v323 = vunpack.c.l.b16 %v305
    %v324 = vunpack.c.l.b16 %v306
    %v325 = vpack.c.b16 %v322, %v321
    %v326 = vpack.c.b16 %v324, %v323
    %v330 = vsel %vm172, %v316, 0
    %332 = vmatprep.subr.bf16.mxu0 0
    %333 = vmatpush1.bf16.msra.mxu0 %v325
    %334 = vmatprep.subr.bf16.mxu0 0
    %335 = vmatpush1.bf16.msra.mxu0 %v326
    %336 = vmatprep.subr.bf16.mxu0 0
    %337 = vmatpush1.bf16.msra.mxu0 0
    %338 = vmatprep.subr.bf16.mxu0 0
    %339 = vmatpush1.bf16.msra.mxu0 0
    %340 = vmatprep.subr.bf16.mxu0 0
    %341 = vmatpush1.bf16.msra.mxu0 0
    %342 = vmatprep.subr.bf16.mxu0 0
    %343 = vmatpush1.bf16.msra.mxu0 0
    %344 = vmatprep.subr.bf16.mxu0 0
    %345 = vmatpush1.bf16.msra.mxu0 0
    %346 = vmatprep.subr.bf16.mxu0 0
    %347 = vmatpush1.bf16.msra.mxu0 0
    %348 = vmatprep.subr.bf16.mxu0 0
    %349 = vmatpush1.bf16.msra.mxu0 0
    %350 = vmatprep.subr.bf16.mxu0 0
    %351 = vmatpush1.bf16.msra.mxu0 0
    %352 = vmatprep.subr.bf16.mxu0 0
    %353 = vmatpush1.bf16.msra.mxu0 0
    %354 = vmatprep.subr.bf16.mxu0 0
    %355 = vmatpush1.bf16.msra.mxu0 0
    %356 = vmatprep.subr.bf16.mxu0 0
    %357 = vmatpush1.bf16.msra.mxu0 0
    %358 = vmatprep.subr.bf16.mxu0 0
    %359 = vmatpush1.bf16.msra.mxu0 0
    %360 = vmatprep.subr.bf16.mxu0 0
    %361 = vmatpush1.bf16.msra.mxu0 0
    %362 = vmatprep.subr.bf16.mxu0 0
    %363 = vmatpush1.bf16.msra.mxu0 0
    %364 = vmatprep.mubr.bf16.mxu0 0
    %365 = vmatmul.mubr.bf16.gmra.mrb[0].mxu0 %v330
    %v366 = vpop.f32.mrb[0].mxu0
    %v367 = vadd.f32 %v312, %v366
    %v368 = vpop.f32.mrb[0].mxu0
    %v369 = vpop.f32.mrb[0].mxu0
    %v370 = vpop.f32.mrb[0].mxu0
    %371 = vdwg.mxu0
    %vm372 = vcmask 1043456
    %v373 = vsel %vm372, %v367, -inf
    %374 = vmax.xlane.f32.xlu0 %v373
    %v375 = vpop.xlane.xlu0 %374
    %v376 = vsub.f32 %v367, %v375
    %v377 = vmul.f32 %v376, 1.442695
    %v378 = vpow.pop %v377
    %v379 = vsel %vm372, %v378, 0.0
    %380 = vadd.xlane.f32.xlu0 %v379
    %v381 = vpop.xlane.xlu0 %380
    %v382 = vlog2.pop %v381
    %v383 = vmul.f32 %v382, 0.6931472
    %v384 = vsub.f32 %v376, %v383
    %385 = vst [vmem:[#allocation2] sm:$0xf] %v384
    // Predicated region
    $region34: #{_lstm_rnn_decoder.1} parent=1 // pred_check
      _
    $region35: #{_lstm_rnn_decoder.1} parent=1 // pred_check_branch
      %387 = sbr.rel (0) target = $region37
    $region36: #{_lstm_rnn_decoder.1} parent=1 // pred_region
      %s389 = ssub.s32 64, 64
      %390 = vsyncadd [#allocation3], %s389
      %s392 = sshll.u32 [#allocation2], 4
      %s393 = int_to_ptr.vmem [resolvable:$true] %s392
      %395 = dma.vmem_to_hbm [thread:$0]  %s393, 64, %s8, [#allocation3]
    $region37: #{_lstm_rnn_decoder.1} parent=1 // pred_fallthru
      _
    // Predicated region
    $region38: #{_lstm_rnn_decoder.1} parent=1 // pred_check
      _
    $region39: #{_lstm_rnn_decoder.1} parent=1 // pred_check_branch
      %397 = sbr.rel (0) target = $region41
    $region40: #{_lstm_rnn_decoder.1} parent=1 // pred_region
      _
    $region41: #{_lstm_rnn_decoder.1} parent=1 // pred_fallthru
      _
    // Predicated region
    $region42: #{_lstm_rnn_decoder.1} parent=1 // pred_check
      _
    $region43: #{_lstm_rnn_decoder.1} parent=1 // pred_check_branch
      %399 = sbr.rel (0) target = $region45
    $region44: #{_lstm_rnn_decoder.1} parent=1 // pred_region
      %400 = dma.done [#allocation3], 64
    $region45: #{_lstm_rnn_decoder.1} parent=1 // pred_fallthru
      _
    // Predicated region
    $region46: #{_lstm_rnn_decoder.1} parent=1 // pred_check
      _
    $region47: #{_lstm_rnn_decoder.1} parent=1 // pred_check_branch
      %402 = sbr.rel (0) target = $region49
    $region48: #{_lstm_rnn_decoder.1} parent=1 // pred_region
      _
    $region49: #{_lstm_rnn_decoder.1} parent=1 // pred_fallthru
      _
    %403 = vsyncpa [#allocation3], 1

</llo_original>
